<compile_context>
chip_gen: v5e
topology: v5e:2x2
jax: 0.10.0
libtpu: 0.0.40
codegen_flags: <defaults>
</compile_context>

<pallas_src>
import jax
import jax.numpy as jnp
from jax.experimental import pallas as pl
from jax.experimental.pallas import tpu as pltpu


def _mlp_kernel(x_ref, w1_ref, b1_ref, w2_ref, b2_ref, o_ref):
    # Cast the f32 batch tile to the matmul dtype on the VPU (avoids a separate
    # wrapper-side XLA cast pass over x in HBM).
    x = x_ref[...].astype(w1_ref.dtype)                                 # (TB, D) bf16
    h = jnp.dot(x, w1_ref[...], preferred_element_type=jnp.float32)     # (TB, H) f32 (MXU)
    h = jnp.maximum(h + b1_ref[...], 0.0)                               # bias + ReLU in f32
    # dropout(p=0.5) is identity at inference time.
    out = jnp.dot(h.astype(w2_ref.dtype), w2_ref[...],
                  preferred_element_type=jnp.float32)                   # (TB, C_pad) f32 (MXU)
    o_ref[...] = (out + b2_ref[...]).astype(o_ref.dtype)


def _round_up(n, m):
    return pl.cdiv(n, m) * m


def nn_forward(x, w1, b1, w2, b2, *, block_b=4096,
               matmul_dtype=jnp.bfloat16, out_dtype=jnp.bfloat16,
               trim_output=True):
    """Fused forward pass for the NN module (eval-mode semantics).

    Args:
      x:  (B, D)   float32
      w1: (D, 128), b1: (128,) or (1, 128)
      w2: (128, C), b2: (C,)   or (1, C)
    Returns:
      (B, C) logits in `out_dtype` (or (B, C_pad) if trim_output=False).
    """
    B, D = x.shape
    H = w1.shape[1]
    C = w2.shape[1]

    b1 = jnp.reshape(b1, (1, H))
    b2 = jnp.reshape(b2, (1, C))

    # ---- Lane-dense output: pad the class dim (N of the 2nd matmul) up to 128 lanes.
    C_pad = _round_up(C, 128)
    if C_pad != C:
        w2 = jnp.pad(w2, ((0, 0), (0, C_pad - C)))
        b2 = jnp.pad(b2, ((0, 0), (0, C_pad - C)))

    # ---- Batch tile:
    #  * multiple of 8 sublanes,
    #  * at most block_b (default 4096 keeps double-buffered tiles ~3 MiB; if you raise
    #    block_b past ~4096 on v5e, also set vmem_limit_bytes in CompilerParams),
    #  * small enough that the grid has >=4 steps when B allows (v7x megacore split).
    TB = max(8, min(_round_up(block_b, 8), _round_up(pl.cdiv(B, 4), 8)))
    grid = (pl.cdiv(B, TB),)   # ragged last tile: OOB reads only feed discarded rows;
                               # OOB output stores are masked by Pallas.

    # Weights/biases are tiny (<=64 KiB); casting/padding them in the wrapper is free.
    # x is deliberately left untouched in HBM (no pad, no cast).
    w1 = w1.astype(matmul_dtype)
    w2 = w2.astype(matmul_dtype)
    b1 = b1.astype(jnp.float32)
    b2 = b2.astype(jnp.float32)

    out = pl.pallas_call(
        _mlp_kernel,
        out_shape=jax.ShapeDtypeStruct((B, C_pad), out_dtype),
        grid=grid,
        in_specs=[
            pl.BlockSpec((TB, D), lambda i: (i, 0)),      # x streams per batch tile (f32)
            pl.BlockSpec((D, H), lambda i: (0, 0)),       # w1 resident (bf16)
            pl.BlockSpec((1, H), lambda i: (0, 0)),       # b1 resident (f32)
            pl.BlockSpec((H, C_pad), lambda i: (0, 0)),   # w2 resident (bf16, lane-padded)
            pl.BlockSpec((1, C_pad), lambda i: (0, 0)),   # b2 resident (f32, lane-padded)
        ],
        out_specs=pl.BlockSpec((TB, C_pad), lambda i: (i, 0)),
        compiler_params=pltpu.CompilerParams(
            dimension_semantics=("parallel",),            # megacore split on v7x
        ),
    )(x, w1, b1, w2, b2)

    # Optional lane-trim outside the kernel; skip (trim_output=False) if downstream can
    # consume the padded (B, 128) slab directly and save this extra pass.
    if trim_output and C_pad != C:
        out = out[:, :C]
    return out


def _reference(x, w1, b1, w2, b2):
    h = jnp.maximum(x @ w1 + jnp.reshape(b1, (1, -1)), 0.0)
    return h @ w2 + jnp.reshape(b2, (1, -1))


if __name__ == "__main__":
    # Small shapes consistent with the module: B=8 batch, D=32 features,
    # hidden=128 (fixed by the module), C=10 classes.
    B, D, H, C = 8, 32, 128, 10

    key = jax.random.PRNGKey(0)
    kx, k1, k2, k3, k4 = jax.random.split(key, 5)

    x = jax.random.normal(kx, (B, D), dtype=jnp.float32)

    # Deterministic parameter init (uniform, roughly matching nn.Linear scale).
    bound1 = 1.0 / (D ** 0.5)
    w1 = jax.random.uniform(k1, (D, H), jnp.float32, -bound1, bound1)
    b1 = jax.random.uniform(k2, (1, H), jnp.float32, -bound1, bound1)
    bound2 = 1.0 / (H ** 0.5)
    w2 = jax.random.uniform(k3, (H, C), jnp.float32, -bound2, bound2)
    b2 = jax.random.uniform(k4, (1, C), jnp.float32, -bound2, bound2)

    # Single-tile path.
    out = jax.block_until_ready(nn_forward(x, w1, b1, w2, b2))
    ref = _reference(x, w1, b1, w2, b2)
    assert out.shape == (B, C)
    # bf16 matmul inputs + bf16 output with f32 accumulation -> loose tolerance vs f32.
    assert jnp.allclose(out.astype(jnp.float32), ref, atol=3e-2, rtol=3e-2), \
        "mismatch vs reference (single tile)"

    # Multi-tile streaming path (grid > 1) with a ragged batch (last tile partial).
    B2 = 37
    x2 = jax.random.normal(jax.random.PRNGKey(1), (B2, D), dtype=jnp.float32)
    out2 = jax.block_until_ready(nn_forward(x2, w1, b1, w2, b2, block_b=16))
    ref2 = _reference(x2, w1, b1, w2, b2)
    assert out2.shape == (B2, C)
    assert jnp.allclose(out2.astype(jnp.float32), ref2, atol=3e-2, rtol=3e-2), \
        "mismatch vs reference (multi tile, ragged)"

    print("KERNEL_OK")
</pallas_src>

<mosaic_0001>
module attributes {stable_mosaic.version = 11 : i64} {
  func.func @_mlp_kernel(%arg0: i32, %arg1: memref<8x32xf32, #tpu.memory_space<vmem>>, %arg2: memref<32x128xbf16, #tpu.memory_space<vmem>>, %arg3: memref<1x128xf32, #tpu.memory_space<vmem>>, %arg4: memref<128x128xbf16, #tpu.memory_space<vmem>>, %arg5: memref<1x128xf32, #tpu.memory_space<vmem>>, %arg6: memref<8x128xbf16, #tpu.memory_space<vmem>>) attributes {dimension_semantics = [#tpu.dimension_semantics<parallel>], iteration_bounds = array<i64: 1>, scalar_prefetch = 0 : i64, scratch_operands = 0 : i64, tpu.core_type = #tpu.core_type<tc>, window_params = [{transform_indices = @transform_0, window_bounds = array<i64: 8, 32>}, {pipeline_mode = #tpu.pipeline_mode<synchronous>, transform_indices = @transform_1, window_bounds = array<i64: 32, 128>}, {pipeline_mode = #tpu.pipeline_mode<synchronous>, transform_indices = @transform_2, window_bounds = array<i64: 1, 128>}, {pipeline_mode = #tpu.pipeline_mode<synchronous>, transform_indices = @transform_3, window_bounds = array<i64: 128, 128>}, {pipeline_mode = #tpu.pipeline_mode<synchronous>, transform_indices = @transform_4, window_bounds = array<i64: 1, 128>}, {transform_indices = @transform_5, window_bounds = array<i64: 8, 128>}]} {
    %c0 = arith.constant 0 : index
    %c0_0 = arith.constant 0 : index
    %0 = vector.load %arg1[%c0, %c0_0] : memref<8x32xf32, #tpu.memory_space<vmem>>, vector<8x32xf32>
    %1 = arith.truncf %0 : vector<8x32xf32> to vector<8x32xbf16>
    %c0_1 = arith.constant 0 : index
    %c0_2 = arith.constant 0 : index
    %2 = vector.load %arg2[%c0_1, %c0_2] : memref<32x128xbf16, #tpu.memory_space<vmem>>, vector<32x128xbf16>
    %cst = arith.constant dense<0.000000e+00> : vector<8x128xf32>
    %3 = tpu.matmul %1, %2, %cst {dimension_numbers = #tpu.dot_dimension_numbers<[1], [0], [0], [1], [0, 0, 1, 1], [], []>} : vector<8x32xbf16>, vector<32x128xbf16>, vector<8x128xf32> -> vector<8x128xf32>
    %c0_3 = arith.constant 0 : index
    %c0_4 = arith.constant 0 : index
    %4 = vector.load %arg3[%c0_3, %c0_4] : memref<1x128xf32, #tpu.memory_space<vmem>>, vector<1x128xf32>
    %5 = vector.broadcast %4 : vector<1x128xf32> to vector<8x128xf32>
    %6 = arith.addf %3, %5 : vector<8x128xf32>
    %cst_5 = arith.constant 0.000000e+00 : f32
    %7 = vector.broadcast %cst_5 : f32 to vector<8x128xf32>
    %8 = arith.maximumf %6, %7 : vector<8x128xf32>
    %9 = arith.truncf %8 : vector<8x128xf32> to vector<8x128xbf16>
    %c0_6 = arith.constant 0 : index
    %c0_7 = arith.constant 0 : index
    %10 = vector.load %arg4[%c0_6, %c0_7] : memref<128x128xbf16, #tpu.memory_space<vmem>>, vector<128x128xbf16>
    %cst_8 = arith.constant dense<0.000000e+00> : vector<8x128xf32>
    %11 = tpu.matmul %9, %10, %cst_8 {dimension_numbers = #tpu.dot_dimension_numbers<[1], [0], [0], [1], [0, 0, 1, 1], [], []>} : vector<8x128xbf16>, vector<128x128xbf16>, vector<8x128xf32> -> vector<8x128xf32>
    %c0_9 = arith.constant 0 : index
    %c0_10 = arith.constant 0 : index
    %12 = vector.load %arg5[%c0_9, %c0_10] : memref<1x128xf32, #tpu.memory_space<vmem>>, vector<1x128xf32>
    %13 = vector.broadcast %12 : vector<1x128xf32> to vector<8x128xf32>
    %14 = arith.addf %11, %13 : vector<8x128xf32>
    %15 = arith.truncf %14 : vector<8x128xf32> to vector<8x128xbf16>
    %c0_11 = arith.constant 0 : index
    %c0_12 = arith.constant 0 : index
    %16 = vector.load %arg6[%c0_11, %c0_12] : memref<8x128xbf16, #tpu.memory_space<vmem>>, vector<8x128xbf16>
    tpu.vector_store %arg6[%c0_11, %c0_12], %15 {strides = array<i32>} : memref<8x128xbf16, #tpu.memory_space<vmem>>, vector<8x128xbf16>,
    return
  }
  func.func @transform_0(%arg0: i32) -> (i32, i32) {
    %c0_i32 = arith.constant 0 : i32
    %c0_i32_0 = arith.constant 0 : i32
    return %arg0, %c0_i32 : i32, i32
  }
  func.func @transform_1(%arg0: i32) -> (i32, i32) {
    %c0_i32 = arith.constant 0 : i32
    %c0_i32_0 = arith.constant 0 : i32
    %c0_i32_1 = arith.constant 0 : i32
    return %c0_i32, %c0_i32_0 : i32, i32
  }
  func.func @transform_2(%arg0: i32) -> (i32, i32) {
    %c0_i32 = arith.constant 0 : i32
    %c0_i32_0 = arith.constant 0 : i32
    %c0_i32_1 = arith.constant 0 : i32
    return %c0_i32, %c0_i32_0 : i32, i32
  }
  func.func @transform_3(%arg0: i32) -> (i32, i32) {
    %c0_i32 = arith.constant 0 : i32
    %c0_i32_0 = arith.constant 0 : i32
    %c0_i32_1 = arith.constant 0 : i32
    return %c0_i32, %c0_i32_0 : i32, i32
  }
  func.func @transform_4(%arg0: i32) -> (i32, i32) {
    %c0_i32 = arith.constant 0 : i32
    %c0_i32_0 = arith.constant 0 : i32
    %c0_i32_1 = arith.constant 0 : i32
    return %c0_i32, %c0_i32_0 : i32, i32
  }
  func.func @transform_5(%arg0: i32) -> (i32, i32) {
    %c0_i32 = arith.constant 0 : i32
    %c0_i32_0 = arith.constant 0 : i32
    return %arg0, %c0_i32 : i32, i32
  }
}

</mosaic_0001>

<llo_original>
// kernel: tpu_custom_call.1
$region0: #{tpu_custom_call.1}
  #allocation0 [shape = 'u32[]', space=smem, size = 0x4, offset = 0x4, fixed_abs, tag = 'smem constant byte address 0x4 - core index']
  #allocation1 [shape = 'u32[72,128]{1,0:T(1,128)}', space=vmem, size = 0x9000, scoped, tag = 'internal scratch']
  %s0 = inlined_call_operand.hbm [shape: f32[8,32], index: 0, kind: input, shape index: {}]
  %s1 = inlined_call_operand.hbm [shape: bf16[32,128], index: 1, kind: input, shape index: {}]
  %s2 = inlined_call_operand.vmem [shape: f32[1,128], index: 2, kind: input, shape index: {}]
  %s3 = inlined_call_operand.hbm [shape: bf16[128,128], index: 3, kind: input, shape index: {}]
  %s4 = inlined_call_operand.vmem [shape: f32[1,128], index: 4, kind: input, shape index: {}]
  %s5 = inlined_call_operand.hbm [shape: bf16[8,128], index: 5, kind: output, shape index: {}]
  %s6 = sld [smem:[#allocation0]]
  $region42: #{tpu_custom_call.1} parent=0
    _
  %s8 = ssub.s32 1, %s6
  %s9 = scalar_select 0, %s8, %s6
  $region1: #{tpu_custom_call.1} parent=0
    #allocation2 [shape = 'u8[4096]{0}', space=vmem, size = 0x1000, scoped, tag = 'input window, operand 0, single buffered']
    #allocation3 [shape = 's32[1]{0}', space=sflag, size = 0x4, scoped, tag = 'scoped memory for tpu_custom_call.1']
    #allocation4 [shape = 's32[1]{0}', space=sflag, size = 0x4, scoped, tag = 'scoped memory for tpu_custom_call.1']
    #allocation5 [shape = 'u8[8192]{0}', space=vmem, size = 0x2000, scoped, tag = 'input window, operand 1, single buffered']
    #allocation6 [shape = 's32[1]{0}', space=sflag, size = 0x4, scoped, tag = 'scoped memory for tpu_custom_call.1']
    #allocation7 [shape = 'u8[32768]{0}', space=vmem, size = 0x8000, scoped, tag = 'input window, operand 3, single buffered']
    #allocation8 [shape = 'u8[2048]{0}', space=vmem, size = 0x800, scoped, tag = 'output window, operand 0, single buffered']
    %10 = vsyncpa [#allocation3], 0
    %11 = vsyncpa [#allocation6], 0
    %12 = vsyncpa [#allocation4], 0
    // Predicated region
    $region2: #{tpu_custom_call.1} parent=1 // pred_check
      _
    $region3: #{tpu_custom_call.1} parent=1 // pred_check_branch
      %14 = sbr.rel (0) target = $region5
    $region4: #{tpu_custom_call.1} parent=1 // pred_region
      %16 = vsyncadd [#allocation3], 0
      %s18 = sshll.u32 %s0, 4
      %s19 = int_to_ptr.hbm [resolvable:$true] %s18
      %s20 = sshll.u32 [#allocation2], 4
      %s21 = int_to_ptr.vmem [resolvable:$true] %s20
      %23 = dma.hbm_to_vmem [thread:$0]  %s19, 128, %s21, [#allocation3]
    $region5: #{tpu_custom_call.1} parent=1 // pred_fallthru
      _
    // Predicated region
    $region6: #{tpu_custom_call.1} parent=1 // pred_check
      _
    $region7: #{tpu_custom_call.1} parent=1 // pred_check_branch
      %25 = sbr.rel (0) target = $region9
    $region8: #{tpu_custom_call.1} parent=1 // pred_region
      %27 = vsyncadd [#allocation6], 0
      %s28 = sshll.u32 %s1, 4
      %s29 = int_to_ptr.hbm [resolvable:$true] %s28
      %s30 = sshll.u32 [#allocation5], 4
      %s31 = int_to_ptr.vmem [resolvable:$true] %s30
      %36 = dma.hbm_to_vmem [thread:$0]  %s29, 256, %s31, [#allocation6], 64, 64, 4
    $region9: #{tpu_custom_call.1} parent=1 // pred_fallthru
      _
    // Predicated region
    $region10: #{tpu_custom_call.1} parent=1 // pred_check
      _
    $region11: #{tpu_custom_call.1} parent=1 // pred_check_branch
      %38 = sbr.rel (0) target = $region13
    $region12: #{tpu_custom_call.1} parent=1 // pred_region
      _
    $region13: #{tpu_custom_call.1} parent=1 // pred_fallthru
      _
    // Predicated region
    $region14: #{tpu_custom_call.1} parent=1 // pred_check
      _
    $region15: #{tpu_custom_call.1} parent=1 // pred_check_branch
      %40 = sbr.rel (0) target = $region17
    $region16: #{tpu_custom_call.1} parent=1 // pred_region
      %42 = vsyncadd [#allocation6], 0
      %s43 = sshll.u32 %s3, 4
      %s44 = int_to_ptr.hbm [resolvable:$true] %s43
      %s45 = sshll.u32 [#allocation7], 4
      %s46 = int_to_ptr.vmem [resolvable:$true] %s45
      %51 = dma.hbm_to_vmem [thread:$0]  %s44, 1024, %s46, [#allocation6], 64, 64, 4
    $region17: #{tpu_custom_call.1} parent=1 // pred_fallthru
      _
    // Predicated region
    $region18: #{tpu_custom_call.1} parent=1 // pred_check
      _
    $region19: #{tpu_custom_call.1} parent=1 // pred_check_branch
      %53 = sbr.rel (0) target = $region21
    $region20: #{tpu_custom_call.1} parent=1 // pred_region
      _
    $region21: #{tpu_custom_call.1} parent=1 // pred_fallthru
      _
    // Predicated region
    $region22: #{tpu_custom_call.1} parent=1 // pred_check
      _
    $region23: #{tpu_custom_call.1} parent=1 // pred_check_branch
      %55 = sbr.rel (0) target = $region25
    $region24: #{tpu_custom_call.1} parent=1 // pred_region
      %57 = dma.done [#allocation3], 128
    $region25: #{tpu_custom_call.1} parent=1 // pred_fallthru
      _
    // Predicated region
    $region26: #{tpu_custom_call.1} parent=1 // pred_check
      _
    $region27: #{tpu_custom_call.1} parent=1 // pred_check_branch
      %59 = sbr.rel (0) target = $region29
    $region28: #{tpu_custom_call.1} parent=1 // pred_region
      %61 = dma.done [#allocation6], 256
    $region29: #{tpu_custom_call.1} parent=1 // pred_fallthru
      _
    // Predicated region
    $region30: #{tpu_custom_call.1} parent=1 // pred_check
      _
    $region31: #{tpu_custom_call.1} parent=1 // pred_check_branch
      %63 = sbr.rel (0) target = $region33
    $region32: #{tpu_custom_call.1} parent=1 // pred_region
      %65 = dma.done [#allocation6], 1024
    $region33: #{tpu_custom_call.1} parent=1 // pred_fallthru
      _
    %v67 = vld [vmem:[#allocation2] sm:$0xff]
    %v68 = vpack.c.bf16 %v67, %v67
    %v69 = vld [vmem:[#allocation5] sm:$0xf]
    %v70 = vld [vmem:[#allocation5 + $0x4] sm:$0xf]
    %v71 = vld [vmem:[#allocation5 + $0x8] sm:$0xf]
    %v72 = vld [vmem:[#allocation5 + $0xc] sm:$0xf]
    %v73 = vld [vmem:[%s2] sm:$0x1]
    %v75 = vperm.slane %v73, 0
    %v81 = vunpack.c.l.b16 %v69
    %v82 = vunpack.c.l.b16 %v70
    %v83 = vunpack.c.l.b16 %v71
    %v84 = vunpack.c.l.b16 %v72
    %v85 = vpack.c.b16 %v82, %v81
    %v86 = vpack.c.b16 %v84, %v83
    %vm89 = vcmask 261120
    %v91 = vsel %vm89, %v68, 0
    %93 = vmatpush.bf16.msra.mxu0 0
    %94 = vmatpush.bf16.msra.mxu0 0
    %95 = vmatpush.bf16.msra.mxu0 0
    %96 = vmatpush.bf16.msra.mxu0 0
    %97 = vmatpush.bf16.msra.mxu0 0
    %98 = vmatpush.bf16.msra.mxu0 0
    %99 = vmatpush.bf16.msra.mxu0 %v86
    %100 = vmatpush.bf16.msra.mxu0 %v85
    %101 = vmatmul.bf16.gmra.mxu0 %v91
    %v102 = vpop.f32.mrf.mxu0
    %v103 = vadd.f32 %v75, %v102
    %v104 = vpop.f32.mrf.mxu0
    %105 = vdwg.mxu0
    %v106 = vmax.f32 %v103, 0.0
    %v107 = vpack.c.bf16 %v106, %v106
    %v108 = vld [vmem:[#allocation7] sm:$0xf]
    %v109 = vld [vmem:[#allocation7 + $0x4] sm:$0xf]
    %v110 = vld [vmem:[#allocation7 + $0x8] sm:$0xf]
    %v111 = vld [vmem:[#allocation7 + $0xc] sm:$0xf]
    %v112 = vld [vmem:[#allocation7 + $0x10] sm:$0xf]
    %v113 = vld [vmem:[#allocation7 + $0x14] sm:$0xf]
    %v114 = vld [vmem:[#allocation7 + $0x18] sm:$0xf]
    %v115 = vld [vmem:[#allocation7 + $0x1c] sm:$0xf]
    %v116 = vld [vmem:[#allocation7 + $0x20] sm:$0xf]
    %v117 = vld [vmem:[#allocation7 + $0x24] sm:$0xf]
    %v118 = vld [vmem:[#allocation7 + $0x28] sm:$0xf]
    %v119 = vld [vmem:[#allocation7 + $0x2c] sm:$0xf]
    %v120 = vld [vmem:[#allocation7 + $0x30] sm:$0xf]
    %v121 = vld [vmem:[#allocation7 + $0x34] sm:$0xf]
    %v122 = vld [vmem:[#allocation7 + $0x38] sm:$0xf]
    %v123 = vld [vmem:[#allocation7 + $0x3c] sm:$0xf]
    %v124 = vld [vmem:[%s4] sm:$0x1]
    %v126 = vperm.slane %v124, 0
    %v144 = vunpack.c.l.b16 %v108
    %v145 = vunpack.c.l.b16 %v109
    %v146 = vunpack.c.l.b16 %v110
    %v147 = vunpack.c.l.b16 %v111
    %v148 = vunpack.c.l.b16 %v112
    %v149 = vunpack.c.l.b16 %v113
    %v150 = vunpack.c.l.b16 %v114
    %v151 = vunpack.c.l.b16 %v115
    %v152 = vunpack.c.l.b16 %v116
    %v153 = vunpack.c.l.b16 %v117
    %v154 = vunpack.c.l.b16 %v118
    %v155 = vunpack.c.l.b16 %v119
    %v156 = vunpack.c.l.b16 %v120
    %v157 = vunpack.c.l.b16 %v121
    %v158 = vunpack.c.l.b16 %v122
    %v159 = vunpack.c.l.b16 %v123
    %v160 = vpack.c.b16 %v145, %v144
    %v161 = vpack.c.b16 %v147, %v146
    %v162 = vpack.c.b16 %v149, %v148
    %v163 = vpack.c.b16 %v151, %v150
    %v164 = vpack.c.b16 %v153, %v152
    %v165 = vpack.c.b16 %v155, %v154
    %v166 = vpack.c.b16 %v157, %v156
    %v167 = vpack.c.b16 %v159, %v158
    %176 = vmatpush.bf16.msra.mxu0 %v167
    %177 = vmatpush.bf16.msra.mxu0 %v166
    %178 = vmatpush.bf16.msra.mxu0 %v165
    %179 = vmatpush.bf16.msra.mxu0 %v164
    %180 = vmatpush.bf16.msra.mxu0 %v163
    %181 = vmatpush.bf16.msra.mxu0 %v162
    %182 = vmatpush.bf16.msra.mxu0 %v161
    %183 = vmatpush.bf16.msra.mxu0 %v160
    %184 = vmatmul.bf16.gmra.mxu0 %v107
    %v185 = vpop.f32.mrf.mxu0
    %v186 = vadd.f32 %v126, %v185
    %v187 = vpop.f32.mrf.mxu0
    %188 = vdwg.mxu0
    %v189 = vpack.c.bf16 %v186, %v186
    %190 = vst [vmem:[#allocation8] sm:$0xf] %v189
    // Predicated region
    $region34: #{tpu_custom_call.1} parent=1 // pred_check
      _
    $region35: #{tpu_custom_call.1} parent=1 // pred_check_branch
      %192 = sbr.rel (0) target = $region37
    $region36: #{tpu_custom_call.1} parent=1 // pred_region
      %194 = vsyncadd [#allocation4], 0
      %s196 = sshll.u32 [#allocation8], 4
      %s197 = int_to_ptr.vmem [resolvable:$true] %s196
      %s198 = sshll.u32 %s5, 4
      %s199 = int_to_ptr.hbm [resolvable:$true] %s198
      %201 = dma.vmem_to_hbm [thread:$0]  %s197, 64, %s199, [#allocation4]
    $region37: #{tpu_custom_call.1} parent=1 // pred_fallthru
      _
    // Predicated region
    $region38: #{tpu_custom_call.1} parent=1 // pred_check
      _
    $region39: #{tpu_custom_call.1} parent=1 // pred_check_branch
      %203 = sbr.rel (0) target = $region41
    $region40: #{tpu_custom_call.1} parent=1 // pred_region
      %205 = dma.done [#allocation4], 64
    $region41: #{tpu_custom_call.1} parent=1 // pred_fallthru
      _
    %206 = vsyncpa [#allocation3], 1
    %207 = vsyncpa [#allocation6], 1
    %208 = vsyncpa [#allocation4], 1

</llo_original>
